<compile_context>
chip_gen: v7x
topology: tpu7x:2x2x1
jax: 0.10.0
libtpu: 0.0.40
codegen_flags: <defaults>
</compile_context>

<pallas_src>
import functools

import jax
import jax.numpy as jnp
from jax.experimental import pallas as pl
from jax.experimental.pallas import tpu as pltpu

_NEG_INIT = -3.0e38  # finite "-inf" for the running max / masked columns (avoids NaN)


def _soft_ce_kernel(pred_ref, tgt_ref, out_ref,
                    m_ref, l_ref, acc_ref, *,
                    confidence, smooth_val, tile_c, c_actual, last_chunk_ragged):
    kc = pl.program_id(1)                 # class-chunk index (reduction axis, 'arbitrary')
    n_kc = pl.num_programs(1)

    @pl.when(kc == 0)
    def _():
        m_ref[...] = jnp.full(m_ref.shape, _NEG_INIT, jnp.float32)
        l_ref[...] = jnp.zeros(l_ref.shape, jnp.float32)
        acc_ref[...] = jnp.zeros(acc_ref.shape, jnp.float32)

    x = pred_ref[...].astype(jnp.float32)          # (TB, TC)
    tgt_local = tgt_ref[...] - kc * tile_c         # (TB, 1) int32 (local class offset)
    local = jax.lax.broadcasted_iota(jnp.int32, x.shape, 1)

    onehot = local == tgt_local
    # true_dist weights: confidence at target, smooth elsewhere (sums to 1 over classes)
    w = jnp.where(onehot, jnp.float32(confidence), jnp.float32(smooth_val))

    def update(x_for_max, x_for_sum):
        # Online logsumexp across class chunks.
        m_prev = m_ref[...]
        m_new = jnp.maximum(m_prev, jnp.max(x_for_max, axis=-1, keepdims=True))
        l_ref[...] = (l_ref[...] * jnp.exp(m_prev - m_new)
                      + jnp.sum(jnp.exp(x_for_max - m_new), axis=-1, keepdims=True))
        m_ref[...] = m_new
        # Single merged weighted accumulator: sum_c true_dist[i,c] * x[i,c].
        acc_ref[...] += jnp.sum(w * x_for_sum, axis=-1, keepdims=True)

    if last_chunk_ragged:
        # Interior chunks: mask-free fast path (bulk of the data).
        @pl.when(kc < n_kc - 1)
        def _():
            update(x, x)

        # Last chunk: out-of-range columns hold undefined data -> mask before reductions.
        @pl.when(kc == n_kc - 1)
        def _():
            col_valid = local < (c_actual - kc * tile_c)
            x_max_src = jnp.where(col_valid, x, jnp.float32(_NEG_INIT))
            x_sum_src = jnp.where(col_valid, x, jnp.float32(0.0))
            update(x_max_src, x_sum_src)
    else:
        update(x, x)

    @pl.when(kc == n_kc - 1)
    def _():
        # loss_i = -sum_c true_dist[i,c] * (x[i,c] - lse_i) = lse_i - sum_c w[i,c]*x[i,c]
        lse = m_ref[...] + jnp.log(l_ref[...])
        out_ref[...] = lse - acc_ref[...]


def _round_up(x, m):
    return (x + m - 1) // m * m


def _tpu_defaults():
    """Generation-aware block/VMEM defaults (conservative fallback if detection fails)."""
    try:
        vmem = int(pltpu.get_tpu_info().vmem_capacity_bytes)
    except Exception:
        vmem = None
    if vmem is not None and vmem <= 96 * 1024 * 1024:
        # v7x-class: 64 MiB VMEM per TensorCore, 2 TCs/chip sharing HBM.
        return dict(pred_block_bytes=2 * 1024 * 1024,
                    vmem_limit_bytes=min(44 * 1024 * 1024, vmem * 3 // 4),
                    min_batch_tiles=4)
    if vmem is not None:
        # v5e / v6e: 128 MiB VMEM, single TensorCore -> big streaming blocks.
        return dict(pred_block_bytes=8 * 1024 * 1024,
                    vmem_limit_bytes=min(80 * 1024 * 1024, vmem * 3 // 4),
                    min_batch_tiles=1)
    # Unknown hardware: conservative settings that fit every generation.
    return dict(pred_block_bytes=4 * 1024 * 1024,
                vmem_limit_bytes=32 * 1024 * 1024,
                min_batch_tiles=2)


def soft_cross_entropy(pred, target, *, classes, smoothing=0.1, dim=-1,
                       weight=None, reduction="mean", k=0.8,
                       max_class_chunk=2048,
                       pred_block_bytes=None, vmem_limit_bytes=None):
    """pred: (N, C) float, target: (N,) int.  Returns scalar loss (float32)."""
    assert 0 <= smoothing < 1
    assert pred.ndim == 2
    assert dim in (-1, 1), "only class-on-last-axis is supported"
    N, C = pred.shape
    assert classes == C, "smoothing denominator assumes classes == pred.shape[-1]"
    if weight is not None:
        # TODO(synk): per-class weight rescaling of log-probs not implemented in-kernel.
        raise NotImplementedError("weight is not supported by the Pallas kernel")

    confidence = 1.0 - smoothing
    smooth_val = smoothing / (classes - 1) if classes > 1 else 0.0

    hw = _tpu_defaults()
    if pred_block_bytes is None:
        pred_block_bytes = hw["pred_block_bytes"]
    if vmem_limit_bytes is None:
        vmem_limit_bytes = hw["vmem_limit_bytes"]
    min_batch_tiles = hw["min_batch_tiles"]

    elem_bytes = jnp.dtype(pred.dtype).itemsize

    # ----- class chunking (lane axis) --------------------------------------
    if C <= max_class_chunk:
        tile_c = C                         # whole row in one chunk (full-dim block is legal)
    else:
        tile_c = max_class_chunk           # multiple of 128 (lane rule)
    n_cc = pl.cdiv(C, tile_c)
    last_chunk_ragged = (C % tile_c) != 0

    # ----- batch tiling (sublane axis) --------------------------------------
    # Size purely from the byte target, then clamp by a VMEM working-set estimate
    # (double-buffered input block + ~5 f32-block temporaries), the megacore
    # batch-tile-count target, and the batch itself.  Multiple of 16 (bf16-safe).
    tile_b = pred_block_bytes // max(1, tile_c * elem_bytes)
    per_row_bytes = tile_c * (2 * elem_bytes + 5 * 4)
    tile_b = min(tile_b, (vmem_limit_bytes * 9 // 10) // max(1, per_row_bytes), 8192)
    if min_batch_tiles > 1:
        tile_b = min(tile_b, -(-N // min_batch_tiles))   # keep all TensorCores busy
    tile_b = max(16, (int(tile_b) // 16) * 16)
    tile_b = min(tile_b, _round_up(N, 16))               # don't over-tile tiny batches
    n_bt = pl.cdiv(N, tile_b)

    kernel = functools.partial(
        _soft_ce_kernel,
        confidence=float(confidence),
        smooth_val=float(smooth_val),
        tile_c=int(tile_c),
        c_actual=int(C),
        last_chunk_ragged=bool(last_chunk_ragged),
    )

    per_row = pl.pallas_call(
        kernel,
        out_shape=jax.ShapeDtypeStruct((N, 1), jnp.float32),
        grid=(n_bt, n_cc),
        in_specs=[
            pl.BlockSpec((tile_b, tile_c), lambda bi, ci: (bi, ci)),
            pl.BlockSpec((tile_b, 1), lambda bi, ci: (bi, 0)),
        ],
        out_specs=pl.BlockSpec((tile_b, 1), lambda bi, ci: (bi, 0)),
        scratch_shapes=[
            pltpu.VMEM((tile_b, 1), jnp.float32),   # running max m
            pltpu.VMEM((tile_b, 1), jnp.float32),   # running sum-exp l
            pltpu.VMEM((tile_b, 1), jnp.float32),   # sum_c true_dist*x accumulator
        ],
        compiler_params=pltpu.CompilerParams(
            dimension_semantics=("parallel", "arbitrary"),
            vmem_limit_bytes=int(vmem_limit_bytes),
        ),
        cost_estimate=pl.CostEstimate(
            flops=6 * N * C,
            transcendentals=N * C,
            bytes_accessed=N * C * elem_bytes + 8 * N,
        ),
    )(pred, target.reshape(N, 1).astype(jnp.int32))

    losses = per_row[:, 0]
    if reduction == "mean":
        return jnp.mean(losses)
    elif reduction == "topk":
        top, _ = jax.lax.top_k(losses, int(N * k))
        return jnp.mean(top)
    raise ValueError(f"unsupported reduction: {reduction!r}")


def _reference(pred, target, *, classes, smoothing=0.1, reduction="mean", k=0.8):
    logp = jax.nn.log_softmax(pred.astype(jnp.float32), axis=-1)
    true_dist = jnp.full_like(logp, smoothing / (classes - 1))
    onehot = jax.nn.one_hot(target, classes, dtype=jnp.bool_)
    true_dist = jnp.where(onehot, 1.0 - smoothing, true_dist)
    losses = jnp.sum(-true_dist * logp, axis=-1)
    if reduction == "mean":
        return jnp.mean(losses)
    top, _ = jax.lax.top_k(losses, int(losses.shape[0] * k))
    return jnp.mean(top)


if __name__ == "__main__":
    key = jax.random.PRNGKey(0)
    k1, k2, k3, k4 = jax.random.split(key, 4)

    # 1) single-chunk path, ragged batch (20 rows -> partial row block, no wrapper pad), f32.
    N, C = 20, 160
    pred = jax.random.normal(k1, (N, C), dtype=jnp.float32)
    target = jax.random.randint(k2, (N,), 0, C, dtype=jnp.int32)

    loss = jax.block_until_ready(
        soft_cross_entropy(pred, target, classes=C, smoothing=0.1))
    ref = _reference(pred, target, classes=C, smoothing=0.1)
    assert jnp.allclose(loss, ref, rtol=1e-5, atol=1e-5), (loss, ref)

    # 'topk' reduction (wrapper-side on the kernel's per-row losses).
    loss_tk = jax.block_until_ready(
        soft_cross_entropy(pred, target, classes=C, smoothing=0.1,
                           reduction="topk", k=0.8))
    ref_tk = _reference(pred, target, classes=C, smoothing=0.1,
                        reduction="topk", k=0.8)
    assert jnp.allclose(loss_tk, ref_tk, rtol=1e-5, atol=1e-5), (loss_tk, ref_tk)

    # 2) class-chunked online-logsumexp path with a ragged (masked) last chunk and
    #    ragged batch rows, bf16 input.
    N2, C2 = 24, 288
    pred2 = jax.random.normal(k3, (N2, C2), dtype=jnp.bfloat16)
    target2 = jax.random.randint(k4, (N2,), 0, C2, dtype=jnp.int32)

    loss2 = jax.block_until_ready(
        soft_cross_entropy(pred2, target2, classes=C2, smoothing=0.1,
                           max_class_chunk=128))
    ref2 = _reference(pred2, target2, classes=C2, smoothing=0.1)
    assert jnp.allclose(loss2, ref2, rtol=1e-3, atol=1e-3), (loss2, ref2)

    print("KERNEL_OK")
</pallas_src>

<mosaic_0001>
module attributes {stable_mosaic.version = 11 : i64} {
  func.func @_soft_ce_kernel(%arg0: i32, %arg1: i32, %arg2: memref<16x160xf32, #tpu.memory_space<vmem>>, %arg3: memref<16x1xi32, #tpu.memory_space<vmem>>, %arg4: memref<16x1xf32, #tpu.memory_space<vmem>>, %arg5: memref<16x1xf32, #tpu.memory_space<vmem>>, %arg6: memref<16x1xf32, #tpu.memory_space<vmem>>, %arg7: memref<16x1xf32, #tpu.memory_space<vmem>>) attributes {dimension_semantics = [#tpu.dimension_semantics<parallel>, #tpu.dimension_semantics<arbitrary>], iteration_bounds = array<i64: 2, 1>, scalar_prefetch = 0 : i64, scratch_operands = 3 : i64, tpu.core_type = #tpu.core_type<tc>, window_params = [{transform_indices = @transform_0, window_bounds = array<i64: 16, 160>}, {transform_indices = @transform_1, window_bounds = array<i64: 16, 1>}, {transform_indices = @transform_2, window_bounds = array<i64: 16, 1>}]} {
    %c0_i32 = arith.constant 0 : i32
    %0 = arith.cmpi eq, %arg1, %c0_i32 : i32
    %1 = arith.extui %0 : i1 to i32
    %c0_i32_0 = arith.constant 0 : i32
    %2 = arith.cmpi ne, %1, %c0_i32_0 : i32
    scf.if %2 {
      %cst_22 = arith.constant -3.000000e+38 : f32
      %39 = vector.broadcast %cst_22 : f32 to vector<16x1xf32>
      %c0_23 = arith.constant 0 : index
      %c0_24 = arith.constant 0 : index
      %40 = vector.load %arg5[%c0_23, %c0_24] : memref<16x1xf32, #tpu.memory_space<vmem>>, vector<16x1xf32>
      tpu.vector_store %arg5[%c0_23, %c0_24], %39 {strides = array<i32>} : memref<16x1xf32, #tpu.memory_space<vmem>>, vector<16x1xf32>,
      %cst_25 = arith.constant 0.000000e+00 : f32
      %41 = vector.broadcast %cst_25 : f32 to vector<16x1xf32>
      %c0_26 = arith.constant 0 : index
      %c0_27 = arith.constant 0 : index
      %42 = vector.load %arg6[%c0_26, %c0_27] : memref<16x1xf32, #tpu.memory_space<vmem>>, vector<16x1xf32>
      tpu.vector_store %arg6[%c0_26, %c0_27], %41 {strides = array<i32>} : memref<16x1xf32, #tpu.memory_space<vmem>>, vector<16x1xf32>,
      %cst_28 = arith.constant 0.000000e+00 : f32
      %43 = vector.broadcast %cst_28 : f32 to vector<16x1xf32>
      %c0_29 = arith.constant 0 : index
      %c0_30 = arith.constant 0 : index
      %44 = vector.load %arg7[%c0_29, %c0_30] : memref<16x1xf32, #tpu.memory_space<vmem>>, vector<16x1xf32>
      tpu.vector_store %arg7[%c0_29, %c0_30], %43 {strides = array<i32>} : memref<16x1xf32, #tpu.memory_space<vmem>>, vector<16x1xf32>,
    } else {
    }
    %c0 = arith.constant 0 : index
    %c0_1 = arith.constant 0 : index
    %3 = vector.load %arg2[%c0, %c0_1] : memref<16x160xf32, #tpu.memory_space<vmem>>, vector<16x160xf32>
    %c0_2 = arith.constant 0 : index
    %c0_3 = arith.constant 0 : index
    %4 = vector.load %arg3[%c0_2, %c0_3] : memref<16x1xi32, #tpu.memory_space<vmem>>, vector<16x1xi32>
    %c160_i32 = arith.constant 160 : i32
    %5 = arith.muli %arg1, %c160_i32 : i32
    %6 = vector.broadcast %5 : i32 to vector<16x1xi32>
    %7 = arith.subi %4, %6 : vector<16x1xi32>
    %8 = tpu.iota {dimensions = array<i32: 1>} : vector<16x160xi32>
    %9 = vector.broadcast %7 : vector<16x1xi32> to vector<16x160xi32>
    %10 = arith.cmpi eq, %8, %9 : vector<16x160xi32>
    %cst = arith.constant 0.899999976 : f32
    %cst_4 = arith.constant 6.28930808E-4 : f32
    %11 = vector.broadcast %cst : f32 to vector<16x160xf32>
    %12 = vector.broadcast %cst_4 : f32 to vector<16x160xf32>
    %13 = arith.select %10, %11, %12 : vector<16x160xi1>, vector<16x160xf32>
    %c0_5 = arith.constant 0 : index
    %c0_6 = arith.constant 0 : index
    %14 = vector.load %arg5[%c0_5, %c0_6] : memref<16x1xf32, #tpu.memory_space<vmem>>, vector<16x1xf32>
    %cst_7 = arith.constant dense<0xFF800000> : vector<16xf32>
    %15 = vector.multi_reduction <maximumf>, %3, %cst_7 [1] : vector<16x160xf32> to vector<16xf32>
    %16 = vector.shape_cast %15 : vector<16xf32> to vector<16x1xf32>
    %17 = arith.maximumf %14, %16 : vector<16x1xf32>
    %c0_8 = arith.constant 0 : index
    %c0_9 = arith.constant 0 : index
    %18 = vector.load %arg6[%c0_8, %c0_9] : memref<16x1xf32, #tpu.memory_space<vmem>>, vector<16x1xf32>
    %19 = arith.subf %14, %17 : vector<16x1xf32>
    %20 = math.exp %19 : vector<16x1xf32>
    %21 = arith.mulf %18, %20 : vector<16x1xf32>
    %22 = vector.broadcast %17 : vector<16x1xf32> to vector<16x160xf32>
    %23 = arith.subf %3, %22 : vector<16x160xf32>
    %24 = math.exp %23 : vector<16x160xf32>
    %cst_10 = arith.constant dense<0.000000e+00> : vector<16xf32>
    %25 = vector.multi_reduction <add>, %24, %cst_10 [1] : vector<16x160xf32> to vector<16xf32>
    %26 = vector.shape_cast %25 : vector<16xf32> to vector<16x1xf32>
    %27 = arith.addf %21, %26 : vector<16x1xf32>
    %c0_11 = arith.constant 0 : index
    %c0_12 = arith.constant 0 : index
    %28 = vector.load %arg6[%c0_11, %c0_12] : memref<16x1xf32, #tpu.memory_space<vmem>>, vector<16x1xf32>
    tpu.vector_store %arg6[%c0_11, %c0_12], %27 {strides = array<i32>} : memref<16x1xf32, #tpu.memory_space<vmem>>, vector<16x1xf32>,
    %c0_13 = arith.constant 0 : index
    %c0_14 = arith.constant 0 : index
    %29 = vector.load %arg5[%c0_13, %c0_14] : memref<16x1xf32, #tpu.memory_space<vmem>>, vector<16x1xf32>
    tpu.vector_store %arg5[%c0_13, %c0_14], %17 {strides = array<i32>} : memref<16x1xf32, #tpu.memory_space<vmem>>, vector<16x1xf32>,
    %c0_15 = arith.constant 0 : index
    %c0_16 = arith.constant 0 : index
    %30 = vector.load %arg7[%c0_15, %c0_16] : memref<16x1xf32, #tpu.memory_space<vmem>>, vector<16x1xf32>
    %31 = arith.mulf %13, %3 : vector<16x160xf32>
    %cst_17 = arith.constant dense<0.000000e+00> : vector<16xf32>
    %32 = vector.multi_reduction <add>, %31, %cst_17 [1] : vector<16x160xf32> to vector<16xf32>
    %33 = vector.shape_cast %32 : vector<16xf32> to vector<16x1xf32>
    %34 = arith.addf %30, %33 : vector<16x1xf32>
    %c0_18 = arith.constant 0 : index
    %c0_19 = arith.constant 0 : index
    %35 = vector.load %arg7[%c0_18, %c0_19] : memref<16x1xf32, #tpu.memory_space<vmem>>, vector<16x1xf32>
    tpu.vector_store %arg7[%c0_18, %c0_19], %34 {strides = array<i32>} : memref<16x1xf32, #tpu.memory_space<vmem>>, vector<16x1xf32>,
    %c0_i32_20 = arith.constant 0 : i32
    %36 = arith.cmpi eq, %arg1, %c0_i32_20 : i32
    %37 = arith.extui %36 : i1 to i32
    %c0_i32_21 = arith.constant 0 : i32
    %38 = arith.cmpi ne, %37, %c0_i32_21 : i32
    scf.if %38 {
      %c0_22 = arith.constant 0 : index
      %c0_23 = arith.constant 0 : index
      %39 = vector.load %arg5[%c0_22, %c0_23] : memref<16x1xf32, #tpu.memory_space<vmem>>, vector<16x1xf32>
      %c0_24 = arith.constant 0 : index
      %c0_25 = arith.constant 0 : index
      %40 = vector.load %arg6[%c0_24, %c0_25] : memref<16x1xf32, #tpu.memory_space<vmem>>, vector<16x1xf32>
      %41 = math.log %40 : vector<16x1xf32>
      %42 = arith.addf %39, %41 : vector<16x1xf32>
      %c0_26 = arith.constant 0 : index
      %c0_27 = arith.constant 0 : index
      %43 = vector.load %arg7[%c0_26, %c0_27] : memref<16x1xf32, #tpu.memory_space<vmem>>, vector<16x1xf32>
      %44 = arith.subf %42, %43 : vector<16x1xf32>
      %c0_28 = arith.constant 0 : index
      %c0_29 = arith.constant 0 : index
      %45 = vector.load %arg4[%c0_28, %c0_29] : memref<16x1xf32, #tpu.memory_space<vmem>>, vector<16x1xf32>
      tpu.vector_store %arg4[%c0_28, %c0_29], %44 {strides = array<i32>} : memref<16x1xf32, #tpu.memory_space<vmem>>, vector<16x1xf32>,
    } else {
    }
    return
  }
  func.func @transform_0(%arg0: i32, %arg1: i32) -> (i32, i32) {
    %c0_i32 = arith.constant 0 : i32
    return %arg0, %arg1 : i32, i32
  }
  func.func @transform_1(%arg0: i32, %arg1: i32) -> (i32, i32) {
    %c0_i32 = arith.constant 0 : i32
    %c0_i32_0 = arith.constant 0 : i32
    return %arg0, %c0_i32 : i32, i32
  }
  func.func @transform_2(%arg0: i32, %arg1: i32) -> (i32, i32) {
    %c0_i32 = arith.constant 0 : i32
    %c0_i32_0 = arith.constant 0 : i32
    return %arg0, %c0_i32 : i32, i32
  }
}

</mosaic_0001>

<llo_original>
// kernel: tpu_custom_call.1
$region0: #{tpu_custom_call.1}
  #allocation0 [shape = 'u32[]', space=smem, size = 0x4, offset = 0x4, fixed_abs, tag = 'smem constant byte address 0x4 - core index']
  #allocation1 [shape = 'u32[144,128]{1,0:T(1,128)}', space=vmem, size = 0x12000, scoped, tag = 'internal scratch']
  #allocation2 [shape = 'f32[16,1]{1,0:T(8,128)}', space=vmem, size = 0x2000, scoped, tag = 'scratch operand']
  #allocation3 [shape = 'f32[16,1]{1,0:T(8,128)}', space=vmem, size = 0x2000, scoped, tag = 'scratch operand']
  #allocation4 [shape = 'f32[16,1]{1,0:T(8,128)}', space=vmem, size = 0x2000, scoped, tag = 'scratch operand']
  %s0 = inlined_call_operand.hbm [shape: f32[20,160], index: 0, kind: input, shape index: {}]
  %s1 = inlined_call_operand.vmem [shape: s32[20,1], index: 1, kind: input, shape index: {}]
  %s2 = inlined_call_operand.vmem [shape: f32[20,1], index: 2, kind: output, shape index: {}]
  %s3 = sld [smem:[#allocation0]]
  $region101: #{tpu_custom_call.1} parent=0
    _
  %s5 = ssub.s32 1, %s3
  %s6 = scalar_select 0, %s5, %s3
  $region1: #{tpu_custom_call.1} parent=0
    #allocation5 [shape = 'u8[32768]{0}', space=vmem, size = 0x8000, scoped, tag = 'input window, operand 0']
    #allocation6 [shape = 's32[2]{0}', space=sflag, size = 0x8, scoped, tag = 'scoped memory for tpu_custom_call.1']
    #allocation7 [shape = 'u8[16384]{0}', space=vmem, size = 0x4000, scoped, tag = 'output window, operand 0']
    %7 = vsyncpa [#allocation6], 0
    %s8 = scalar_lea.sflag [#allocation6], 1
    %9 = vsyncpa %s8, 0
    loop: start=0, step=1, limit=4
    $region2: #{tpu_custom_call.1} parent=1 // loop_pre_header
      _
    $region3: #{tpu_custom_call.1} parent=1 // loop_header
      %s11 = sphi 0, %s15
      %p12 = scmp.ge.s32.totalorder %s11, 4
      %s18 = sphi 0, %s30
      %s19 = sphi 0, %s26
      %s20 = sphi 0, %s18
      %s21 = sphi 0, %s19
      %s22 = sphi 0, %s20
      %s23 = sphi 0, %s21
      %s35 = sphi 0, %s37
      %s38 = sphi 0, %s35
      %s39 = sphi 0, %s38
      %s55 = sphi 0, %s39
      %s61 = sphi 0, %s63
      %s64 = sphi 0, %s61
      %s65 = sphi 0, %s64
      %s81 = sphi 0, %s65
      %s87 = sphi 0, %s89
      %s90 = sphi 0, %s87
      %s91 = sphi 0, %s90
      %s107 = sphi 0, %s91
    $region4: #{tpu_custom_call.1} parent=1 // loop_header_branch
      %14 = sbr.rel (%p12) target = $region8
    $region5: #{tpu_custom_call.1} parent=1 // loop_body
      %s16 = ssub.s32 %s11, 1
      %s17 = ssub.s32 %s11, 2
      %s24 = sadd.s32 1, %s19
      %p25 = scmp.ge.s32.totalorder %s24, 1
      %s26 = scalar_select %p25, 0, %s24
      %s27 = sadd.s32 1, %s18
      %s28 = scalar_select %p25, %s27, %s18
      %p29 = scmp.ge.s32.totalorder %s28, 2
      %s30 = scalar_select %p29, 0, %s28
      %s31 = ssub.s32 %s18, %s30
      %s32 = ssub.s32 %s19, %s26
      %s33 = sor.u32 %s31, %s32
      %p34 = scmp.eq.s32.totalorder %s33, 0
      %s36 = sadd.s32 %s35, 1
      %s37 = scalar_select %p34, %s35, %s36
      %p40 = pneg %p34
      %p41 = scmp.eq.s32.totalorder %s11, 1
      %p42 = por %p40, %p41
      %p43 = scmp.ne.s32.totalorder %s35, %s38
      %p44 = scmp.eq.s32.totalorder %s11, 0
      %p45 = por %p43, %p44
      %p46 = scmp.ne.s32.totalorder %s35, %s38
      %p47 = scmp.eq.s32.totalorder %s16, 1
      %p48 = por %p46, %p47
      %p49 = scmp.ne.s32.totalorder %s38, %s39
      %p50 = scmp.eq.s32.totalorder %s16, 0
      %p51 = por %p49, %p50
      %p52 = scmp.ne.s32.totalorder %s38, %s39
      %p53 = scmp.eq.s32.totalorder %s17, 1
      %p54 = por %p52, %p53
      %p56 = scmp.ne.s32.totalorder %s39, %s55
      %p57 = scmp.eq.s32.totalorder %s17, 0
      %p58 = por %p56, %p57
      %s59 = ssub.s32 %s18, %s30
      %p60 = scmp.eq.s32.totalorder %s59, 0
      %s62 = sadd.s32 %s61, 1
      %s63 = scalar_select %p60, %s61, %s62
      %p66 = pneg %p60
      %p67 = scmp.eq.s32.totalorder %s11, 1
      %p68 = por %p66, %p67
      %p69 = scmp.ne.s32.totalorder %s61, %s64
      %p70 = scmp.eq.s32.totalorder %s11, 0
      %p71 = por %p69, %p70
      %p72 = scmp.ne.s32.totalorder %s61, %s64
      %p73 = scmp.eq.s32.totalorder %s16, 1
      %p74 = por %p72, %p73
      %p75 = scmp.ne.s32.totalorder %s64, %s65
      %p76 = scmp.eq.s32.totalorder %s16, 0
      %p77 = por %p75, %p76
      %p78 = scmp.ne.s32.totalorder %s64, %s65
      %p79 = scmp.eq.s32.totalorder %s17, 1
      %p80 = por %p78, %p79
      %p82 = scmp.ne.s32.totalorder %s65, %s81
      %p83 = scmp.eq.s32.totalorder %s17, 0
      %p84 = por %p82, %p83
      %s85 = ssub.s32 %s18, %s30
      %p86 = scmp.eq.s32.totalorder %s85, 0
      %s88 = sadd.s32 %s87, 1
      %s89 = scalar_select %p86, %s87, %s88
      %p92 = pneg %p86
      %p93 = scmp.eq.s32.totalorder %s11, 1
      %p94 = por %p92, %p93
      %p95 = scmp.ne.s32.totalorder %s87, %s90
      %p96 = scmp.eq.s32.totalorder %s11, 0
      %p97 = por %p95, %p96
      %p98 = scmp.ne.s32.totalorder %s87, %s90
      %p99 = scmp.eq.s32.totalorder %s16, 1
      %p100 = por %p98, %p99
      %p101 = scmp.ne.s32.totalorder %s90, %s91
      %p102 = scmp.eq.s32.totalorder %s16, 0
      %p103 = por %p101, %p102
      %p104 = scmp.ne.s32.totalorder %s90, %s91
      %p105 = scmp.eq.s32.totalorder %s17, 1
      %p106 = por %p104, %p105
      %p108 = scmp.ne.s32.totalorder %s91, %s107
      %p109 = scmp.eq.s32.totalorder %s17, 0
      %p110 = por %p108, %p109
      %p111 = scmp.le.s32.totalorder 1, %s11
      %p112 = scmp.lt.s32.totalorder %s11, 3
      %p113 = pnand %p111, %p112
      %p114 = pneg %p113
      // Predicated region
      $region9: #{tpu_custom_call.1} parent=5 // pred_check
        _
      $region10: #{tpu_custom_call.1} parent=5 // pred_check_branch
        %116 = sbr.rel (%p113) target = $region12
      $region11: #{tpu_custom_call.1} parent=5 // pred_region
        %s117 = ssub.s32 %s11, 1
      $region12: #{tpu_custom_call.1} parent=5 // pred_fallthru
        _
      %p118 = scmp.lt.s32.totalorder %s11, 2
      // Predicated region
      $region13: #{tpu_custom_call.1} parent=5 // pred_check
        %p119 = pneg %p118
      $region14: #{tpu_custom_call.1} parent=5 // pred_check_branch
        %121 = sbr.rel (%p119) target = $region16
      $region15: #{tpu_custom_call.1} parent=5 // pred_region
        // Predicated region
        $region17: #{tpu_custom_call.1} parent=15 // pred_check
          %p122 = pneg %p45
        $region18: #{tpu_custom_call.1} parent=15 // pred_check_branch
          %124 = sbr.rel (%p122) target = $region20
        $region19: #{tpu_custom_call.1} parent=15 // pred_region
          %s125 = sand.u32 %s35, 1
          %s126 = scalar_lea.sflag [#allocation6], %s125
          %s127 = sand.u32 %s35, 1
          %s128 = smul.addr %s127, 32
          %s129 = scalar_lea.vmem [#allocation5], %s128
          %s130 = smul.u32 2, %s18
          %s131 = smul.u32 2, %s19
          %s132 = ssub.s32 3, %s130
          %p133 = scmp.lt.s32.totalorder %s132, 2
          %s134 = scalar_select %p133, %s132, 2
          %s135 = smul.u32 128, %s134
          %s136 = smul.u32 %s135, 2
          %s138 = ssub.s32 512, %s136
          %139 = vsyncadd %s126, %s138
          %p140 = scmp.ne.s32.totalorder 0, %s136
          %s141 = smul.addr %s130, 2
          %s142 = sadd.s32 %s131, %s141
          %s143 = smul.addr %s142, 128
          %s144 = scalar_lea.hbm %s0, %s143
          %s145 = smul.u32 16, %s134
          %s146 = sshll.u32 %s129, 4
          %s147 = int_to_ptr.vmem [resolvable:$true] %s146
          %s148 = sshll.u32 %s145, 4
          %152 = dma.hbm_to_vmem [thread:$0]  (%p140), %s144, %s148, %s147, %s126, 256, 256, 16
        $region20: #{tpu_custom_call.1} parent=15 // pred_fallthru
          _
        // Predicated region
        $region21: #{tpu_custom_call.1} parent=15 // pred_check
          %p153 = pneg %p71
        $region22: #{tpu_custom_call.1} parent=15 // pred_check_branch
          %155 = sbr.rel (%p153) target = $region24
        $region23: #{tpu_custom_call.1} parent=15 // pred_region
          %s156 = smul.u32 2, %s18
          %s157 = ssub.s32 3, %s156
          %p158 = scmp.lt.s32.totalorder %s157, 2
          %s159 = scalar_select %p158, %s157, 2
          %s160 = smul.u32 128, %s159
          %p161 = scmp.lt.s32.totalorder %s156, 2
          %s162 = scalar_select %p161, %s156, 2
          %s163 = smul.addr %s162, 8
          %s164 = scalar_lea.vmem %s1, %s163
          %s165 = smul.u32 2, %s18
          %s166 = ssub.s32 3, %s165
          %p167 = scmp.lt.s32.totalorder %s166, 2
          %s168 = scalar_select %p167, %s166, 2
          %s169 = smul.u32 128, %s168
        $region24: #{tpu_custom_call.1} parent=15 // pred_fallthru
          _
      $region16: #{tpu_custom_call.1} parent=5 // pred_fallthru
        _
      %p170 = scmp.le.s32.totalorder 1, %s11
      %p171 = scmp.lt.s32.totalorder %s11, 3
      %p172 = pnand %p170, %p171
      %p173 = pneg %p172
      // Predicated region
      $region25: #{tpu_custom_call.1} parent=5 // pred_check
        _
      $region26: #{tpu_custom_call.1} parent=5 // pred_check_branch
        %175 = sbr.rel (%p172) target = $region28
      $region27: #{tpu_custom_call.1} parent=5 // pred_region
        %s176 = ssub.s32 %s11, 1
        %s177 = sand.u32 %s38, 1
        %s178 = scalar_lea.sflag [#allocation6], %s177
        %s179 = sand.u32 %s38, 1
        %s180 = smul.addr %s179, 32
        %s181 = scalar_lea.vmem [#allocation5], %s180
        // Predicated region
        $region29: #{tpu_custom_call.1} parent=27 // pred_check
          %p182 = pneg %p51
        $region30: #{tpu_custom_call.1} parent=27 // pred_check_branch
          %184 = sbr.rel (%p182) target = $region32
        $region31: #{tpu_custom_call.1} parent=27 // pred_region
          %185 = dma.done %s178, 512
        $region32: #{tpu_custom_call.1} parent=27 // pred_fallthru
          _
        %s186 = sand.u32 %s38, 1
        %s187 = scalar_lea.sflag [#allocation6], %s186
        %s188 = sand.u32 %s38, 1
        %s189 = smul.addr %s188, 32
        %s190 = scalar_lea.vmem [#allocation5], %s189
        %p191 = pneg %p51
        %p192 = pneg %p48
        %s193 = smul.u32 2, %s20
        %s194 = ssub.s32 3, %s193
        %p195 = scmp.lt.s32.totalorder %s194, 2
        %s196 = scalar_select %p195, %s194, 2
        %s197 = smul.u32 128, %s196
        %p198 = scmp.lt.s32.totalorder %s193, 2
        %s199 = scalar_select %p198, %s193, 2
        %s200 = smul.addr %s199, 8
        %s201 = scalar_lea.vmem %s1, %s200
        %p202 = pneg %p77
        %p203 = pneg %p74
        %p204 = pneg %p103
        %p205 = pneg %p100
        %s206 = sand.u32 %s90, 1
        %s207 = sand.u32 %s90, 1
        %s208 = smul.addr %s207, 16
        %s209 = scalar_lea.vmem [#allocation7], %s208
        %s210 = smul.u32 2, %s20
        %s211 = smul.u32 2, %s21
        %s212 = ssub.s32 3, %s210
        %p213 = scmp.lt.s32.totalorder %s212, 2
        %s214 = scalar_select %p213, %s212, 2
        %s215 = smul.u32 128, %s214
        %s216 = smul.u32 %s215, 2
        %s217 = smul.u32 2, %s20
        %s218 = ssub.s32 3, %s217
        %p219 = scmp.lt.s32.totalorder %s218, 2
        %s220 = scalar_select %p219, %s218, 2
        %s221 = smul.u32 128, %s220
        %p222 = scmp.lt.s32.totalorder %s217, 2
        %s223 = scalar_select %p222, %s217, 2
        %s224 = smul.addr %s223, 8
        %s225 = scalar_lea.vmem %s1, %s224
        %s226 = smul.u32 2, %s20
        %s227 = ssub.s32 3, %s226
        %p228 = scmp.lt.s32.totalorder %s227, 2
        %s229 = scalar_select %p228, %s227, 2
        %s230 = smul.u32 128, %s229
        %s231 = smul.u32 2, %s20
        %s232 = ssub.s32 3, %s231
        %p233 = scmp.lt.s32.totalorder %s232, 2
        %s234 = scalar_select %p233, %s232, 2
        %s235 = smul.u32 128, %s234
        %p236 = scmp.eq.s32.totalorder %s21, 0
        // Predicated region
        $region33: #{tpu_custom_call.1} parent=27 // pred_check
          %p237 = pneg %p236
        $region34: #{tpu_custom_call.1} parent=27 // pred_check_branch
          %239 = sbr.rel (%p237) target = $region36
        $region35: #{tpu_custom_call.1} parent=27 // pred_region
          %vm240 = vcmask 7168
          %241 = vst.msk [vmem:[#allocation2] sm:$0xff] %vm240, -3e+38
          %242 = vst.msk [vmem:[#allocation2 + $0x8] sm:$0xff] %vm240, -3e+38
          %243 = vst.msk [vmem:[#allocation3] sm:$0xff] %vm240, 0.0
          %244 = vst.msk [vmem:[#allocation3 + $0x8] sm:$0xff] %vm240, 0.0
          %245 = vst.msk [vmem:[#allocation4] sm:$0xff] %vm240, 0.0
          %246 = vst.msk [vmem:[#allocation4 + $0x8] sm:$0xff] %vm240, 0.0
        $region36: #{tpu_custom_call.1} parent=27 // pred_fallthru
          _
        %v247 = vld [vmem:[%s181] sm:$0xff]
        %v248 = vld [vmem:[%s181 + $0x8] sm:$0xff]
        %v249 = vld [vmem:[%s181 + $0x10] sm:$0xff]
        %v250 = vld [vmem:[%s181 + $0x18] sm:$0xff]
        %v251 = vld [vmem:[%s225] sm:$0xff]
        %v252 = vld [vmem:[%s225 + $0x8] sm:$0xff]
        %s253 = smul.u32 %s21, 160
        %v254 = vstv %s253
        %v255 = vsub.s32 %v251, %v254
        %v256 = vsub.s32 %v252, %v254
        %v257 = vlaneseq
        %v258 = vand.u32 %v257, 127
        %v259 = vadd.s32 %v258, 128
        %260 = vset.pattern.permute.xlu0 0
        %261 = vperm.xlu0 %260, %v255
        %v262 = vpop.permute.xlu0 %261
        %263 = vset.pattern.permute.xlu0 0
        %264 = vperm.xlu0 %263, %v256
        %v265 = vpop.permute.xlu0 %264
        %vm266 = vcmp.eq.s32.totalorder %v258, %v262
        %vm267 = vcmp.eq.s32.totalorder %v259, %v262
        %vm268 = vcmp.eq.s32.totalorder %v258, %v265
        %vm269 = vcmp.eq.s32.totalorder %v259, %v265
        %v270 = vsel %vm266, 0.9, 0.0006289308
        %v271 = vsel %vm267, 0.9, 0.0006289308
        %v272 = vsel %vm268, 0.9, 0.0006289308
        %v273 = vsel %vm269, 0.9, 0.0006289308
        %v274 = vld [vmem:[#allocation2] sm:$0xff]
        %v275 = vld [vmem:[#allocation2 + $0x8] sm:$0xff]
        %vm276 = vcmask 261120
        %v277 = vsel %vm276, %v248, -inf
        %v278 = vmax.f32 %v247, %v277
        %279 = vmax.xlane.f32.xlu0 %v278
        %v280 = vpop.xlane.xlu0 %279
        %v281 = vsel %vm276, %v250, -inf
        %v282 = vmax.f32 %v249, %v281
        %283 = vmax.xlane.f32.xlu0 %v282
        %v284 = vpop.xlane.xlu0 %283
        %v285 = vmax.f32 %v274, %v280
        %v286 = vmax.f32 %v275, %v284
        %v287 = vld [vmem:[#allocation3] sm:$0xff]
        %v288 = vld [vmem:[#allocation3 + $0x8] sm:$0xff]
        %v289 = vsub.f32 %v274, %v285
        %v290 = vsub.f32 %v275, %v286
        %v291 = vmul.f32 %v289, 1.442695
        %v292 = vpow.pop %v291
        %v293 = vmul.f32 %v290, 1.442695
        %v294 = vpow.pop %v293
        %v295 = vmul.f32 %v287, %v292
        %v296 = vmul.f32 %v288, %v294
        %298 = vset.pattern.permute.xlu0 0
        %299 = vperm.xlu0 %298, %v285
        %v300 = vpop.permute.xlu0 %299
        %303 = vset.pattern.permute.xlu0 0
        %304 = vperm.xlu0 %303, %v286
        %v305 = vpop.permute.xlu0 %304
        %v307 = vsub.f32 %v247, %v300
        %v308 = vsub.f32 %v248, %v300
        %v309 = vsub.f32 %v249, %v305
        %v310 = vsub.f32 %v250, %v305
        %v311 = vmul.f32 %v307, 1.442695
        %v312 = vpow.pop %v311
        %v313 = vmul.f32 %v308, 1.442695
        %v314 = vpow.pop %v313
        %v315 = vmul.f32 %v309, 1.442695
        %v316 = vpow.pop %v315
        %v317 = vmul.f32 %v310, 1.442695
        %v318 = vpow.pop %v317
        %v319 = vsel %vm276, %v314, 0.0
        %v320 = vadd.f32 %v312, %v319
        %321 = vadd.xlane.f32.xlu0 %v320
        %v322 = vpop.xlane.xlu0 %321
        %v323 = vsel %vm276, %v318, 0.0
        %v324 = vadd.f32 %v316, %v323
        %325 = vadd.xlane.f32.xlu0 %v324
        %v326 = vpop.xlane.xlu0 %325
        %v327 = vadd.f32 %v295, %v322
        %v328 = vadd.f32 %v296, %v326
        %vm329 = vcmask 7168
        %330 = vst.msk [vmem:[#allocation3] sm:$0xff] %vm329, %v327
        %331 = vst.msk [vmem:[#allocation3 + $0x8] sm:$0xff] %vm329, %v328
        %332 = vst.msk [vmem:[#allocation2] sm:$0xff] %vm329, %v285
        %333 = vst.msk [vmem:[#allocation2 + $0x8] sm:$0xff] %vm329, %v286
        %v334 = vld [vmem:[#allocation4] sm:$0xff]
        %v335 = vld [vmem:[#allocation4 + $0x8] sm:$0xff]
        %v336 = vmul.f32 %v270, %v247
        %v337 = vmul.f32 %v271, %v248
        %v338 = vmul.f32 %v272, %v249
        %v339 = vmul.f32 %v273, %v250
        %v340 = vsel %vm276, %v337, 0.0
        %v341 = vadd.f32 %v336, %v340
        %342 = vadd.xlane.f32.xlu0 %v341
        %v343 = vpop.xlane.xlu0 %342
        %v344 = vsel %vm276, %v339, 0.0
        %v345 = vadd.f32 %v338, %v344
        %346 = vadd.xlane.f32.xlu0 %v345
        %v347 = vpop.xlane.xlu0 %346
        %v348 = vadd.f32 %v334, %v343
        %v349 = vadd.f32 %v335, %v347
        %350 = vst.msk [vmem:[#allocation4] sm:$0xff] %vm329, %v348
        %351 = vst.msk [vmem:[#allocation4 + $0x8] sm:$0xff] %vm329, %v349
        // Predicated region
        $region37: #{tpu_custom_call.1} parent=27 // pred_check
          %p352 = pneg %p236
        $region38: #{tpu_custom_call.1} parent=27 // pred_check_branch
          %354 = sbr.rel (%p352) target = $region40
        $region39: #{tpu_custom_call.1} parent=27 // pred_region
          %v355 = vld [vmem:[#allocation2] sm:$0xff]
          %v356 = vld [vmem:[#allocation2 + $0x8] sm:$0xff]
          %v357 = vld [vmem:[#allocation3] sm:$0xff]
          %v358 = vld [vmem:[#allocation3 + $0x8] sm:$0xff]
          %v359 = vlog2.pop %v357
          %v360 = vmul.f32 %v359, 0.6931472
          %v361 = vlog2.pop %v358
          %v362 = vmul.f32 %v361, 0.6931472
          %v363 = vadd.f32 %v355, %v360
          %v364 = vadd.f32 %v356, %v362
          %v365 = vld [vmem:[#allocation4] sm:$0xff]
          %v366 = vld [vmem:[#allocation4 + $0x8] sm:$0xff]
          %v367 = vsub.f32 %v363, %v365
          %v368 = vsub.f32 %v364, %v366
          %369 = vst.msk [vmem:[%s209] sm:$0xff] %vm329, %v367
          %370 = vst.msk [vmem:[%s209 + $0x8] sm:$0xff] %vm329, %v368
        $region40: #{tpu_custom_call.1} parent=27 // pred_fallthru
          _
        %s371 = sand.u32 %s90, 1
        %s372 = sand.u32 %s90, 1
        %s373 = smul.addr %s372, 16
        %s374 = scalar_lea.vmem [#allocation7], %s373
        // Predicated region
        $region41: #{tpu_custom_call.1} parent=27 // pred_check
          %p375 = pneg %p100
        $region42: #{tpu_custom_call.1} parent=27 // pred_check_branch
          %377 = sbr.rel (%p375) target = $region44
        $region43: #{tpu_custom_call.1} parent=27 // pred_region
          %s378 = smul.u32 2, %s20
          %s379 = ssub.s32 3, %s378
          %p380 = scmp.lt.s32.totalorder %s379, 2
          %s381 = scalar_select %p380, %s379, 2
          %s382 = smul.u32 128, %s381
          %p383 = scmp.ne.s32.totalorder 0, %s382
          %s384 = smul.addr %s378, 8
          %s385 = scalar_lea.vmem %s2, %s384
          // Predicated region
          $region45: #{tpu_custom_call.1} parent=43 // pred_check
            %p386 = pneg %p383
          $region46: #{tpu_custom_call.1} parent=43 // pred_check_branch
            %388 = sbr.rel (%p386) target = $region48
          $region47: #{tpu_custom_call.1} parent=43 // pred_region
            // Predicated region
            $region49: #{tpu_custom_call.1} parent=47 // pred_check
              _
            $region50: #{tpu_custom_call.1} parent=47 // pred_check_branch
              %390 = sbr.rel (0) target = $region52
            $region51: #{tpu_custom_call.1} parent=47 // pred_region
              // Predicated region
              $region71: #{tpu_custom_call.1} parent=51 // pred_check
                _
              $region72: #{tpu_custom_call.1} parent=51 // pred_check_branch
                %441 = sbr.rel (0) target = $region74
              $region73: #{tpu_custom_call.1} parent=51 // pred_region
                %s442 = sshrl.u32 %s381, 1
                // While loop
                $region75: #{tpu_custom_call.1} parent=73 // loop_pre_header
                  _
                $region76: #{tpu_custom_call.1} parent=73 // loop_header
                  %s444 = sphi 0, %s446
                  %p445 = scmp.ge.s32.totalorder %s444, %s442
                  %s449 = sphi 0, %s458
                  %s450 = sphi %s374, %s461
                  %s451 = sphi %s385, %s462
                $region77: #{tpu_custom_call.1} parent=73 // loop_header_branch
                  %448 = sbr.rel (%p445) target = $region81
                $region78: #{tpu_custom_call.1} parent=73 // loop_body
                  %v452 = vld [vmem:[%s450] sm:$0xff]
                  %453 = vst [vmem:[%s451] sm:$0xff] %v452
                  %v454 = vld [vmem:[%s450 + $0x8] sm:$0xff]
                  %455 = vst [vmem:[%s451 + $0x8] sm:$0xff] %v454
                  %s456 = sadd.s32 1, %s449
                  %p457 = scmp.ge.s32.totalorder %s456, %s442
                  %s458 = scalar_select %p457, 0, %s456
                  %s459 = smul.u32 %s458, 16
                  %s460 = smul.u32 %s458, 16
                  %s461 = scalar_lea.vmem %s374, %s459 [#allocation7]
                  %s462 = scalar_lea.vmem %s385, %s460
                $region79: #{tpu_custom_call.1} parent=73 // loop_footer
                  %s446 = sadd.s32 %s444, 1
                $region80: #{tpu_custom_call.1} parent=73 // loop_footer_branch
                  %443 = sbr.rel target = $region76
                $region81: #{tpu_custom_call.1} parent=73 // loop_exit
                  _
                %s463 = sshrl.u32 %s381, 1
                %s464 = sand.u32 %s381, 1
                %s465 = smul.u32 %s463, 2
                %s466 = smul.u32 8, %s465
                %s467 = scalar_lea.vmem %s374, %s466 [#allocation7]
                %s468 = smul.u32 8, %s465
                %s469 = scalar_lea.vmem %s385, %s468
                // While loop
                $region82: #{tpu_custom_call.1} parent=73 // loop_pre_header
                  _
                $region83: #{tpu_custom_call.1} parent=73 // loop_header
                  %s471 = sphi 0, %s473
                  %p472 = scmp.ge.s32.totalorder %s471, %s464
                  %s476 = sphi 0, %s483
                  %s477 = sphi %s467, %s486
                  %s478 = sphi %s469, %s487
                $region84: #{tpu_custom_call.1} parent=73 // loop_header_branch
                  %475 = sbr.rel (%p472) target = $region88
                $region85: #{tpu_custom_call.1} parent=73 // loop_body
                  %v479 = vld [vmem:[%s477] sm:$0xff]
                  %480 = vst [vmem:[%s478] sm:$0xff] %v479
                  %s481 = sadd.s32 1, %s476
                  %p482 = scmp.ge.s32.totalorder %s481, %s464
                  %s483 = scalar_select %p482, 0, %s481
                  %s484 = smul.u32 %s483, 8
                  %s485 = smul.u32 %s483, 8
                  %s486 = scalar_lea.vmem %s467, %s484 [#allocation7]
                  %s487 = scalar_lea.vmem %s469, %s485
                $region86: #{tpu_custom_call.1} parent=73 // loop_footer
                  %s473 = sadd.s32 %s471, 1
                $region87: #{tpu_custom_call.1} parent=73 // loop_footer_branch
                  %470 = sbr.rel target = $region83
                $region88: #{tpu_custom_call.1} parent=73 // loop_exit
                  _
              $region74: #{tpu_custom_call.1} parent=51 // pred_fallthru
                _
              // Predicated region
              $region89: #{tpu_custom_call.1} parent=51 // pred_check
                _
              $region90: #{tpu_custom_call.1} parent=51 // pred_check_branch
                %489 = sbr.rel target = $region92
              $region91: #{tpu_custom_call.1} parent=51 // pred_region
                _
              $region92: #{tpu_custom_call.1} parent=51 // pred_fallthru
                _
            $region52: #{tpu_custom_call.1} parent=47 // pred_fallthru
              _
            // Predicated region
            $region53: #{tpu_custom_call.1} parent=47 // pred_check
              _
            $region54: #{tpu_custom_call.1} parent=47 // pred_check_branch
              %392 = sbr.rel target = $region56
            $region55: #{tpu_custom_call.1} parent=47 // pred_region
              %s394 = sshrl.u32 %s381, 1
              // While loop
              $region57: #{tpu_custom_call.1} parent=55 // loop_pre_header
                _
              $region58: #{tpu_custom_call.1} parent=55 // loop_header
                %s396 = sphi 0, %s398
                %p397 = scmp.ge.s32.totalorder %s396, %s394
                %s401 = sphi 0, %s410
                %s402 = sphi %s374, %s413
                %s403 = sphi %s385, %s414
              $region59: #{tpu_custom_call.1} parent=55 // loop_header_branch
                %400 = sbr.rel (%p397) target = $region63
              $region60: #{tpu_custom_call.1} parent=55 // loop_body
                %v404 = vld [vmem:[%s402] sm:$0xff]
                %405 = vst [vmem:[%s403] sm:$0xff] %v404
                %v406 = vld [vmem:[%s402 + $0x8] sm:$0xff]
                %407 = vst [vmem:[%s403 + $0x8] sm:$0xff] %v406
                %s408 = sadd.s32 1, %s401
                %p409 = scmp.ge.s32.totalorder %s408, %s394
                %s410 = scalar_select %p409, 0, %s408
                %s411 = smul.u32 %s410, 16
                %s412 = smul.u32 %s410, 16
                %s413 = scalar_lea.vmem %s374, %s411 [#allocation7]
                %s414 = scalar_lea.vmem %s385, %s412
              $region61: #{tpu_custom_call.1} parent=55 // loop_footer
                %s398 = sadd.s32 %s396, 1
              $region62: #{tpu_custom_call.1} parent=55 // loop_footer_branch
                %395 = sbr.rel target = $region58
              $region63: #{tpu_custom_call.1} parent=55 // loop_exit
                _
              %s415 = sshrl.u32 %s381, 1
              %s416 = sand.u32 %s381, 1
              %s417 = smul.u32 %s415, 2
              %s418 = smul.u32 8, %s417
              %s419 = scalar_lea.vmem %s374, %s418 [#allocation7]
              %s420 = smul.u32 8, %s417
              %s421 = scalar_lea.vmem %s385, %s420
              // While loop
              $region64: #{tpu_custom_call.1} parent=55 // loop_pre_header
                _
              $region65: #{tpu_custom_call.1} parent=55 // loop_header
                %s423 = sphi 0, %s425
                %p424 = scmp.ge.s32.totalorder %s423, %s416
                %s428 = sphi 0, %s435
                %s429 = sphi %s419, %s438
                %s430 = sphi %s421, %s439
              $region66: #{tpu_custom_call.1} parent=55 // loop_header_branch
                %427 = sbr.rel (%p424) target = $region70
              $region67: #{tpu_custom_call.1} parent=55 // loop_body
                %v431 = vld [vmem:[%s429] sm:$0xff]
                %432 = vst [vmem:[%s430] sm:$0xff] %v431
                %s433 = sadd.s32 1, %s428
                %p434 = scmp.ge.s32.totalorder %s433, %s416
                %s435 = scalar_select %p434, 0, %s433
                %s436 = smul.u32 %s435, 8
                %s437 = smul.u32 %s435, 8
                %s438 = scalar_lea.vmem %s419, %s436 [#allocation7]
                %s439 = scalar_lea.vmem %s421, %s437
              $region68: #{tpu_custom_call.1} parent=55 // loop_footer
                %s425 = sadd.s32 %s423, 1
              $region69: #{tpu_custom_call.1} parent=55 // loop_footer_branch
                %422 = sbr.rel target = $region65
              $region70: #{tpu_custom_call.1} parent=55 // loop_exit
                _
            $region56: #{tpu_custom_call.1} parent=47 // pred_fallthru
              _
          $region48: #{tpu_custom_call.1} parent=43 // pred_fallthru
            _
          %490 = vnop
        $region44: #{tpu_custom_call.1} parent=27 // pred_fallthru
          _
      $region28: #{tpu_custom_call.1} parent=5 // pred_fallthru
        _
      %p491 = scmp.le.s32.totalorder 2, %s11
      // Predicated region
      $region93: #{tpu_custom_call.1} parent=5 // pred_check
        %p492 = pneg %p491
      $region94: #{tpu_custom_call.1} parent=5 // pred_check_branch
        %494 = sbr.rel (%p492) target = $region96
      $region95: #{tpu_custom_call.1} parent=5 // pred_region
        %s495 = ssub.s32 %s11, 2
        // Predicated region
        $region97: #{tpu_custom_call.1} parent=95 // pred_check
          %p496 = pneg %p106
        $region98: #{tpu_custom_call.1} parent=95 // pred_check_branch
          %498 = sbr.rel (%p496) target = $region100
        $region99: #{tpu_custom_call.1} parent=95 // pred_region
          %s499 = sand.u32 %s91, 1
          %s500 = sand.u32 %s91, 1
          %s501 = smul.addr %s500, 16
          %s502 = scalar_lea.vmem [#allocation7], %s501
        $region100: #{tpu_custom_call.1} parent=95 // pred_fallthru
          _
      $region96: #{tpu_custom_call.1} parent=5 // pred_fallthru
        _
    $region6: #{tpu_custom_call.1} parent=1 // loop_footer
      %s15 = sadd.s32 1, %s11
    $region7: #{tpu_custom_call.1} parent=1 // loop_footer_branch
      %10 = sbr.rel target = $region3
    $region8: #{tpu_custom_call.1} parent=1 // loop_exit
      _
    %503 = vsyncpa [#allocation6], 1
    %s504 = scalar_lea.sflag [#allocation6], 1
    %505 = vsyncpa %s504, 1

</llo_original>
